<compile_context>
chip_gen: v6e
topology: v6e:2x2x1
jax: 0.10.0
libtpu: 0.0.40
codegen_flags: <defaults>
</compile_context>

<pallas_src>
import functools

import jax
import jax.numpy as jnp
from jax.experimental import pallas as pl
from jax.experimental.pallas import tpu as pltpu


def _round_up(v, m):
    return ((v + m - 1) // m) * m


def _cdiv(a, b):
    return -(-a // b)


def _vmem_budget_bytes():
    """~75% of physical per-core VMEM (conservative fallback: v7x's 64 MiB)."""
    cap = 64 << 20
    try:
        info = pltpu.get_tpu_info()
        cap = int(getattr(info, "vmem_capacity_bytes", cap) or cap)
    except Exception:
        pass
    return (cap * 3) // 4


# ---- kernels ----------------------------------------------------------------

def _proj_kernel_resident(x_ref, w_ref, b_ref, o_ref):
    """Single-K-step kernel: weight & bias are VMEM-resident; direct store."""
    acc = jnp.dot(x_ref[...], w_ref[...], preferred_element_type=jnp.float32)
    o_ref[...] = (acc + b_ref[...]).astype(o_ref.dtype)


def _proj_kernel_tiled(x_ref, w_ref, b_ref, o_ref, acc_ref):
    """Fallback: K tiled on the last grid axis, f32 scratch accumulator."""
    k = pl.program_id(2)

    @pl.when(k == 0)
    def _():
        acc_ref[...] = jnp.zeros_like(acc_ref)

    acc_ref[...] += jnp.dot(x_ref[...], w_ref[...],
                            preferred_element_type=jnp.float32)

    @pl.when(k == pl.num_programs(2) - 1)
    def _():
        o_ref[...] = (acc_ref[...] + b_ref[...]).astype(o_ref.dtype)


# ---- wrapper ----------------------------------------------------------------

@functools.partial(jax.jit, static_argnames=("lm_dim",))
def vision_proj_pallas(x, w, b, *, lm_dim=None):
    """y = x @ w + b.

    x: (..., K)           activations
    w: (Kw, Nw)           kernel-layout weight (ve_dim -> lm_dim), Kw >= K;
                          rows K..Kw-1 / cols lm_dim..Nw-1 must be zero padding
    b: (1, Nw) or (Nw,)   bias (float-castable; padded columns ignored)
    lm_dim:               true output feature count (default Nw)
    """
    K = x.shape[-1]
    Kw, Nw = w.shape
    if lm_dim is None:
        lm_dim = Nw
    lead = x.shape[:-1]
    M = 1
    for d in lead:
        M *= d

    out_dtype = x.dtype
    # dtype policy: keep both MXU operands in one dtype; prefer bf16 streaming
    # when the weight is bf16 (accumulation stays f32 in-kernel).
    mm_dtype = jnp.bfloat16 if w.dtype == jnp.bfloat16 else x.dtype

    x2 = x.reshape(M, K)
    if x2.dtype != mm_dtype:
        x2 = x2.astype(mm_dtype)
    if Kw != K:
        # Only K padding affects numerics (the padded weight rows are zero).
        x2 = jnp.pad(x2, ((0, 0), (0, Kw - K)))
    b2 = b.reshape(1, Nw).astype(jnp.float32)

    mm_bytes = jnp.dtype(mm_dtype).itemsize
    w_bytes = jnp.dtype(w.dtype).itemsize
    o_bytes = jnp.dtype(out_dtype).itemsize
    sublane = max(8, 32 // mm_bytes)          # 8 rows f32, 16 bf16, 32 int8/fp8

    budget = _vmem_budget_bytes()

    cost = pl.CostEstimate(
        flops=2 * M * K * lm_dim,
        transcendentals=0,
        bytes_accessed=(M * K * mm_bytes + Kw * Nw * w_bytes
                        + M * lm_dim * o_bytes + Nw * 4),
    )

    def _resident_vmem(tm):
        return (2 * tm * Kw * mm_bytes          # x tiles (double-buffered)
                + 2 * Kw * Nw * w_bytes         # resident weight
                + 2 * Nw * 4                    # bias (f32)
                + 2 * tm * Nw * o_bytes)        # output tiles

    if _resident_vmem(sublane) <= budget:
        # ---- fast path: whole weight + bias resident in VMEM ---------------
        tm_cap = 1024 if mm_bytes <= 2 else 512
        tm = min(tm_cap, _round_up(M, sublane))
        while tm > sublane and _resident_vmem(tm) > budget:
            tm = max(sublane, _round_up(tm // 2, sublane))
        # v7x has 2 TensorCores: give the parallel axis >= 2 blocks when there
        # is enough work to split.
        if _cdiv(M, tm) == 1 and M >= 256:
            tm = _round_up(_cdiv(M, 2), sublane)

        grid = (_cdiv(M, tm),)
        vmem_limit = int(min(budget, max(_resident_vmem(tm) + (8 << 20),
                                         16 << 20)))

        out = pl.pallas_call(
            _proj_kernel_resident,
            out_shape=jax.ShapeDtypeStruct((M, Nw), out_dtype),
            grid_spec=pltpu.PrefetchScalarGridSpec(
                num_scalar_prefetch=0,
                grid=grid,
                in_specs=[
                    pl.BlockSpec((tm, Kw), lambda i: (i, 0)),   # x rows stream
                    pl.BlockSpec((Kw, Nw), lambda i: (0, 0)),   # weight resident
                    pl.BlockSpec((1, Nw), lambda i: (0, 0)),    # bias resident
                ],
                out_specs=pl.BlockSpec((tm, Nw), lambda i: (i, 0)),
            ),
            compiler_params=pltpu.CompilerParams(
                dimension_semantics=("parallel",),
                vmem_limit_bytes=vmem_limit,
            ),
            cost_estimate=cost,
        )(x2, w, b2)
    else:
        # ---- fallback: weight too large to be resident -> tile M/N/K -------
        tm = min(256, _round_up(M, sublane))
        tn = 256 if Nw >= 256 else _round_up(Nw, 128)
        tk = min(512, _round_up(Kw, 128))
        Kp = _round_up(Kw, tk)
        w2 = w
        if Kp != Kw:
            # TODO(synk): cache the K-padded weight outside the call for this path.
            x2 = jnp.pad(x2, ((0, 0), (0, Kp - Kw)))
            w2 = jnp.pad(w2, ((0, Kp - Kw), (0, 0)))

        grid = (_cdiv(M, tm), _cdiv(Nw, tn), Kp // tk)
        tile_bytes = (2 * tm * tk * mm_bytes + 2 * tk * tn * w_bytes
                      + 2 * tn * 4 + 2 * tm * tn * o_bytes + tm * tn * 4)
        vmem_limit = int(min(budget, max(tile_bytes + (8 << 20), 16 << 20)))

        out = pl.pallas_call(
            _proj_kernel_tiled,
            out_shape=jax.ShapeDtypeStruct((M, Nw), out_dtype),
            grid_spec=pltpu.PrefetchScalarGridSpec(
                num_scalar_prefetch=0,
                grid=grid,
                in_specs=[
                    pl.BlockSpec((tm, tk), lambda i, j, k: (i, k)),
                    pl.BlockSpec((tk, tn), lambda i, j, k: (k, j)),
                    pl.BlockSpec((1, tn), lambda i, j, k: (0, j)),
                ],
                out_specs=pl.BlockSpec((tm, tn), lambda i, j, k: (i, j)),
                scratch_shapes=[pltpu.VMEM((tm, tn), jnp.float32)],
            ),
            compiler_params=pltpu.CompilerParams(
                dimension_semantics=("parallel", "parallel", "arbitrary"),
                vmem_limit_bytes=vmem_limit,
            ),
            cost_estimate=cost,
        )(x2, w2, b2)

    if Nw != lm_dim:
        out = out[:, :lm_dim]
    return out.reshape(*lead, lm_dim)


# ---- parameter container mirroring nn.Linear(ve_dim, lm_dim) ----------------

class VisionProjParams:
    """Linear params; weight cached transposed AND padded once (no per-call work)."""

    def __init__(self, ve_dim=768, lm_dim=512, *, key, param_dtype=jnp.float32):
        kw, kb = jax.random.split(key)
        bound = 1.0 / (ve_dim ** 0.5)
        # PyTorch stores weight as (lm_dim, ve_dim); transpose ONCE here.
        w_pt = jax.random.uniform(kw, (lm_dim, ve_dim), jnp.float32, -bound, bound)
        b = jax.random.uniform(kb, (lm_dim,), jnp.float32, -bound, bound)

        Kp = _round_up(ve_dim, 128)
        Np = _round_up(lm_dim, 128)
        w_t = jnp.asarray(w_pt.T, dtype=param_dtype)           # (ve_dim, lm_dim)
        if (Kp, Np) != (ve_dim, lm_dim):
            w_t = jnp.pad(w_t, ((0, Kp - ve_dim), (0, Np - lm_dim)))
        b2 = b.reshape(1, lm_dim).astype(jnp.float32)
        if Np != lm_dim:
            b2 = jnp.pad(b2, ((0, 0), (0, Np - lm_dim)))

        self.weight_t = w_t        # (Kp, Np), zero-padded, kernel layout
        self.bias = b2             # (1, Np), float32
        self.ve_dim, self.lm_dim = ve_dim, lm_dim

    def __call__(self, image_encoders):
        return vision_proj_pallas(image_encoders, self.weight_t, self.bias,
                                  lm_dim=self.lm_dim)


if __name__ == "__main__":
    key = jax.random.PRNGKey(0)
    k_x, k_p = jax.random.split(key)

    # Shapes consistent with the module defaults: ve_dim=768 -> lm_dim=512.
    batch, seq, ve_dim, lm_dim = 2, 8, 768, 512
    x = jax.random.normal(k_x, (batch, seq, ve_dim), jnp.float32)

    # f32 path (resident-weight fast path; direct bias+dot store).
    proj = VisionProjParams(ve_dim, lm_dim, key=k_p, param_dtype=jnp.float32)
    y = jax.block_until_ready(proj(x))
    y_ref = x @ proj.weight_t[:ve_dim, :lm_dim] + proj.bias[0, :lm_dim]
    assert y.shape == (batch, seq, lm_dim)
    assert jnp.allclose(y, y_ref, atol=1e-4, rtol=1e-4)

    # bf16 streaming path (halved HBM bytes; f32 accumulation in-kernel).
    proj16 = VisionProjParams(ve_dim, lm_dim, key=k_p, param_dtype=jnp.bfloat16)
    y16 = jax.block_until_ready(proj16(x.astype(jnp.bfloat16)))
    assert y16.shape == (batch, seq, lm_dim)
    assert y16.dtype == jnp.bfloat16
    assert jnp.allclose(y16.astype(jnp.float32), y_ref, atol=1e-1, rtol=1e-1)

    print("KERNEL_OK")
</pallas_src>

<mosaic_0001>
module attributes {stable_mosaic.version = 11 : i64} {
  func.func @_proj_kernel_resident(%arg0: i32, %arg1: memref<16x768xf32, #tpu.memory_space<vmem>>, %arg2: memref<768x512xf32, #tpu.memory_space<vmem>>, %arg3: memref<1x512xf32, #tpu.memory_space<vmem>>, %arg4: memref<16x512xf32, #tpu.memory_space<vmem>>) attributes {dimension_semantics = [#tpu.dimension_semantics<parallel>], iteration_bounds = array<i64: 1>, scalar_prefetch = 0 : i64, scratch_operands = 0 : i64, tpu.core_type = #tpu.core_type<tc>, window_params = [{transform_indices = @transform_0, window_bounds = array<i64: 16, 768>}, {pipeline_mode = #tpu.pipeline_mode<synchronous>, transform_indices = @transform_1, window_bounds = array<i64: 768, 512>}, {pipeline_mode = #tpu.pipeline_mode<synchronous>, transform_indices = @transform_2, window_bounds = array<i64: 1, 512>}, {transform_indices = @transform_3, window_bounds = array<i64: 16, 512>}]} {
    %c0 = arith.constant 0 : index
    %c0_0 = arith.constant 0 : index
    %0 = vector.load %arg1[%c0, %c0_0] : memref<16x768xf32, #tpu.memory_space<vmem>>, vector<16x768xf32>
    %c0_1 = arith.constant 0 : index
    %c0_2 = arith.constant 0 : index
    %1 = vector.load %arg2[%c0_1, %c0_2] : memref<768x512xf32, #tpu.memory_space<vmem>>, vector<768x512xf32>
    %cst = arith.constant dense<0.000000e+00> : vector<16x512xf32>
    %2 = tpu.matmul %0, %1, %cst {dimension_numbers = #tpu.dot_dimension_numbers<[1], [0], [0], [1], [0, 0, 1, 1], [], []>} : vector<16x768xf32>, vector<768x512xf32>, vector<16x512xf32> -> vector<16x512xf32>
    %c0_3 = arith.constant 0 : index
    %c0_4 = arith.constant 0 : index
    %3 = vector.load %arg3[%c0_3, %c0_4] : memref<1x512xf32, #tpu.memory_space<vmem>>, vector<1x512xf32>
    %4 = vector.broadcast %3 : vector<1x512xf32> to vector<16x512xf32>
    %5 = arith.addf %2, %4 : vector<16x512xf32>
    %c0_5 = arith.constant 0 : index
    %c0_6 = arith.constant 0 : index
    %6 = vector.load %arg4[%c0_5, %c0_6] : memref<16x512xf32, #tpu.memory_space<vmem>>, vector<16x512xf32>
    tpu.vector_store %arg4[%c0_5, %c0_6], %5 {strides = array<i32>} : memref<16x512xf32, #tpu.memory_space<vmem>>, vector<16x512xf32>,
    return
  }
  func.func @transform_0(%arg0: i32) -> (i32, i32) {
    %c0_i32 = arith.constant 0 : i32
    %c0_i32_0 = arith.constant 0 : i32
    return %arg0, %c0_i32 : i32, i32
  }
  func.func @transform_1(%arg0: i32) -> (i32, i32) {
    %c0_i32 = arith.constant 0 : i32
    %c0_i32_0 = arith.constant 0 : i32
    %c0_i32_1 = arith.constant 0 : i32
    return %c0_i32, %c0_i32_0 : i32, i32
  }
  func.func @transform_2(%arg0: i32) -> (i32, i32) {
    %c0_i32 = arith.constant 0 : i32
    %c0_i32_0 = arith.constant 0 : i32
    %c0_i32_1 = arith.constant 0 : i32
    return %c0_i32, %c0_i32_0 : i32, i32
  }
  func.func @transform_3(%arg0: i32) -> (i32, i32) {
    %c0_i32 = arith.constant 0 : i32
    %c0_i32_0 = arith.constant 0 : i32
    return %arg0, %c0_i32 : i32, i32
  }
}

</mosaic_0001>

<llo_original>
// kernel: vision_proj_pallas.1
$region0: #{vision_proj_pallas.1}
  #allocation0 [shape = 'u32[]', space=smem, size = 0x4, offset = 0x4, fixed_abs, tag = 'smem constant byte address 0x4 - core index']
  #allocation1 [shape = 'u32[144,128]{1,0:T(1,128)}', space=vmem, size = 0x12000, scoped, tag = 'internal scratch']
  %s0 = inlined_call_operand.hbm [shape: f32[16,768], index: 0, kind: input, shape index: {}]
  %s1 = inlined_call_operand.hbm [shape: f32[768,512], index: 1, kind: input, shape index: {}]
  %s2 = inlined_call_operand.hbm [shape: f32[1,512], index: 2, kind: input, shape index: {}]
  %s3 = inlined_call_operand.hbm [shape: f32[16,512], index: 3, kind: output, shape index: {}]
  %s4 = sld [smem:[#allocation0]]
  $region34: #{vision_proj_pallas.1} parent=0
    _
  %s6 = ssub.s32 1, %s4
  %s7 = scalar_select 0, %s6, %s4
  $region1: #{vision_proj_pallas.1} parent=0
    #allocation2 [shape = 'u8[49152]{0}', space=vmem, size = 0xc000, scoped, tag = 'input window, operand 0, single buffered']
    #allocation3 [shape = 's32[1]{0}', space=sflag, size = 0x4, scoped, tag = 'scoped memory for vision_proj_pallas.1']
    #allocation4 [shape = 's32[1]{0}', space=sflag, size = 0x4, scoped, tag = 'scoped memory for vision_proj_pallas.1']
    #allocation5 [shape = 'u8[1572864]{0}', space=vmem, size = 0x180000, scoped, tag = 'input window, operand 1, single buffered']
    #allocation6 [shape = 's32[1]{0}', space=sflag, size = 0x4, scoped, tag = 'scoped memory for vision_proj_pallas.1']
    #allocation7 [shape = 'u8[2048]{0}', space=vmem, size = 0x800, scoped, tag = 'input window, operand 2, single buffered']
    #allocation8 [shape = 'u8[32768]{0}', space=vmem, size = 0x8000, scoped, tag = 'output window, operand 0, single buffered']
    %8 = vsyncpa [#allocation3], 0
    %9 = vsyncpa [#allocation6], 0
    %10 = vsyncpa [#allocation4], 0
    // Predicated region
    $region2: #{vision_proj_pallas.1} parent=1 // pred_check
      _
    $region3: #{vision_proj_pallas.1} parent=1 // pred_check_branch
      %12 = sbr.rel (0) target = $region5
    $region4: #{vision_proj_pallas.1} parent=1 // pred_region
      %s14 = ssub.s32 1536, 1536
      %15 = vsyncadd [#allocation3], %s14
      %s16 = sshll.u32 [#allocation2], 4
      %s17 = int_to_ptr.vmem [resolvable:$true] %s16
      %22 = dma.hbm_to_vmem [thread:$0]  %s0, 1536, %s17, [#allocation3], 768, 768, 48
    $region5: #{vision_proj_pallas.1} parent=1 // pred_fallthru
      _
    // Predicated region
    $region6: #{vision_proj_pallas.1} parent=1 // pred_check
      _
    $region7: #{vision_proj_pallas.1} parent=1 // pred_check_branch
      %24 = sbr.rel (0) target = $region9
    $region8: #{vision_proj_pallas.1} parent=1 // pred_region
      %s26 = ssub.s32 49152, 49152
      %27 = vsyncadd [#allocation6], %s26
      %s28 = sshll.u32 [#allocation5], 4
      %s29 = int_to_ptr.vmem [resolvable:$true] %s28
      %34 = dma.hbm_to_vmem [thread:$0]  %s1, 49152, %s29, [#allocation6], 512, 512, 32
    $region9: #{vision_proj_pallas.1} parent=1 // pred_fallthru
      _
    // Predicated region
    $region10: #{vision_proj_pallas.1} parent=1 // pred_check
      _
    $region11: #{vision_proj_pallas.1} parent=1 // pred_check_branch
      %36 = sbr.rel (0) target = $region13
    $region12: #{vision_proj_pallas.1} parent=1 // pred_region
      %s38 = ssub.s32 64, 64
      %39 = vsyncadd [#allocation6], %s38
      %s41 = sshll.u32 [#allocation7], 4
      %s42 = int_to_ptr.vmem [resolvable:$true] %s41
      %44 = dma.hbm_to_vmem [thread:$0]  %s2, 64, %s42, [#allocation6]
    $region13: #{vision_proj_pallas.1} parent=1 // pred_fallthru
      _
    // Predicated region
    $region14: #{vision_proj_pallas.1} parent=1 // pred_check
      _
    $region15: #{vision_proj_pallas.1} parent=1 // pred_check_branch
      %46 = sbr.rel (0) target = $region17
    $region16: #{vision_proj_pallas.1} parent=1 // pred_region
      %47 = dma.done [#allocation3], 1536
    $region17: #{vision_proj_pallas.1} parent=1 // pred_fallthru
      _
    // Predicated region
    $region18: #{vision_proj_pallas.1} parent=1 // pred_check
      _
    $region19: #{vision_proj_pallas.1} parent=1 // pred_check_branch
      %49 = sbr.rel (0) target = $region21
    $region20: #{vision_proj_pallas.1} parent=1 // pred_region
      %50 = dma.done [#allocation6], 49152
    $region21: #{vision_proj_pallas.1} parent=1 // pred_fallthru
      _
    // Predicated region
    $region22: #{vision_proj_pallas.1} parent=1 // pred_check
      _
    $region23: #{vision_proj_pallas.1} parent=1 // pred_check_branch
      %52 = sbr.rel (0) target = $region25
    $region24: #{vision_proj_pallas.1} parent=1 // pred_region
      %53 = dma.done [#allocation6], 64
    $region25: #{vision_proj_pallas.1} parent=1 // pred_fallthru
      _
    %v54 = vld [vmem:[#allocation2] sm:$0xff]
    %v55 = vld [vmem:[#allocation2 + $0x8] sm:$0xff]
    %v56 = vld [vmem:[#allocation2 + $0x10] sm:$0xff]
    %v57 = vld [vmem:[#allocation2 + $0x18] sm:$0xff]
    %v58 = vld [vmem:[#allocation2 + $0x20] sm:$0xff]
    %v59 = vld [vmem:[#allocation2 + $0x28] sm:$0xff]
    %v60 = vld [vmem:[#allocation2 + $0x30] sm:$0xff]
    %v61 = vld [vmem:[#allocation2 + $0x38] sm:$0xff]
    %v62 = vld [vmem:[#allocation2 + $0x40] sm:$0xff]
    %v63 = vld [vmem:[#allocation2 + $0x48] sm:$0xff]
    %v64 = vld [vmem:[#allocation2 + $0x50] sm:$0xff]
    %v65 = vld [vmem:[#allocation2 + $0x58] sm:$0xff]
    %v66 = vld [vmem:[#allocation5] sm:$0xff]
    %v67 = vld [vmem:[#allocation5 + $0x8] sm:$0xff]
    %v68 = vld [vmem:[#allocation5 + $0x10] sm:$0xff]
    %v69 = vld [vmem:[#allocation5 + $0x18] sm:$0xff]
    %v70 = vld [vmem:[#allocation5 + $0x20] sm:$0xff]
    %v71 = vld [vmem:[#allocation5 + $0x28] sm:$0xff]
    %v72 = vld [vmem:[#allocation5 + $0x30] sm:$0xff]
    %v73 = vld [vmem:[#allocation5 + $0x38] sm:$0xff]
    %v74 = vld [vmem:[#allocation5 + $0x40] sm:$0xff]
    %v75 = vld [vmem:[#allocation5 + $0x48] sm:$0xff]
    %v76 = vld [vmem:[#allocation5 + $0x50] sm:$0xff]
    %v77 = vld [vmem:[#allocation5 + $0x58] sm:$0xff]
    %v78 = vld [vmem:[#allocation5 + $0x60] sm:$0xff]
    %v79 = vld [vmem:[#allocation5 + $0x68] sm:$0xff]
    %v80 = vld [vmem:[#allocation5 + $0x70] sm:$0xff]
    %v81 = vld [vmem:[#allocation5 + $0x78] sm:$0xff]
    %v82 = vld [vmem:[#allocation5 + $0x80] sm:$0xff]
    %v83 = vld [vmem:[#allocation5 + $0x88] sm:$0xff]
    %v84 = vld [vmem:[#allocation5 + $0x90] sm:$0xff]
    %v85 = vld [vmem:[#allocation5 + $0x98] sm:$0xff]
    %v86 = vld [vmem:[#allocation5 + $0xa0] sm:$0xff]
    %v87 = vld [vmem:[#allocation5 + $0xa8] sm:$0xff]
    %v88 = vld [vmem:[#allocation5 + $0xb0] sm:$0xff]
    %v89 = vld [vmem:[#allocation5 + $0xb8] sm:$0xff]
    %v90 = vld [vmem:[#allocation5 + $0xc0] sm:$0xff]
    %v91 = vld [vmem:[#allocation5 + $0xc8] sm:$0xff]
    %v92 = vld [vmem:[#allocation5 + $0xd0] sm:$0xff]
    %v93 = vld [vmem:[#allocation5 + $0xd8] sm:$0xff]
    %v94 = vld [vmem:[#allocation5 + $0xe0] sm:$0xff]
    %v95 = vld [vmem:[#allocation5 + $0xe8] sm:$0xff]
    %v96 = vld [vmem:[#allocation5 + $0xf0] sm:$0xff]
    %v97 = vld [vmem:[#allocation5 + $0xf8] sm:$0xff]
    %v98 = vld [vmem:[#allocation5 + $0x100] sm:$0xff]
    %v99 = vld [vmem:[#allocation5 + $0x108] sm:$0xff]
    %v100 = vld [vmem:[#allocation5 + $0x110] sm:$0xff]
    %v101 = vld [vmem:[#allocation5 + $0x118] sm:$0xff]
    %v102 = vld [vmem:[#allocation5 + $0x120] sm:$0xff]
    %v103 = vld [vmem:[#allocation5 + $0x128] sm:$0xff]
    %v104 = vld [vmem:[#allocation5 + $0x130] sm:$0xff]
    %v105 = vld [vmem:[#allocation5 + $0x138] sm:$0xff]
    %v106 = vld [vmem:[#allocation5 + $0x140] sm:$0xff]
    %v107 = vld [vmem:[#allocation5 + $0x148] sm:$0xff]
    %v108 = vld [vmem:[#allocation5 + $0x150] sm:$0xff]
    %v109 = vld [vmem:[#allocation5 + $0x158] sm:$0xff]
    %v110 = vld [vmem:[#allocation5 + $0x160] sm:$0xff]
    %v111 = vld [vmem:[#allocation5 + $0x168] sm:$0xff]
    %v112 = vld [vmem:[#allocation5 + $0x170] sm:$0xff]
    %v113 = vld [vmem:[#allocation5 + $0x178] sm:$0xff]
    %v114 = vld [vmem:[#allocation5 + $0x180] sm:$0xff]
    %v115 = vld [vmem:[#allocation5 + $0x188] sm:$0xff]
    %v116 = vld [vmem:[#allocation5 + $0x190] sm:$0xff]
    %v117 = vld [vmem:[#allocation5 + $0x198] sm:$0xff]
    %v118 = vld [vmem:[#allocation5 + $0x1a0] sm:$0xff]
    %v119 = vld [vmem:[#allocation5 + $0x1a8] sm:$0xff]
    %v120 = vld [vmem:[#allocation5 + $0x1b0] sm:$0xff]
    %v121 = vld [vmem:[#allocation5 + $0x1b8] sm:$0xff]
    %v122 = vld [vmem:[#allocation5 + $0x1c0] sm:$0xff]
    %v123 = vld [vmem:[#allocation5 + $0x1c8] sm:$0xff]
    %v124 = vld [vmem:[#allocation5 + $0x1d0] sm:$0xff]
    %v125 = vld [vmem:[#allocation5 + $0x1d8] sm:$0xff]
    %v126 = vld [vmem:[#allocation5 + $0x1e0] sm:$0xff]
    %v127 = vld [vmem:[#allocation5 + $0x1e8] sm:$0xff]
    %v128 = vld [vmem:[#allocation5 + $0x1f0] sm:$0xff]
    %v129 = vld [vmem:[#allocation5 + $0x1f8] sm:$0xff]
    %v130 = vld [vmem:[#allocation5 + $0x200] sm:$0xff]
    %v131 = vld [vmem:[#allocation5 + $0x208] sm:$0xff]
    %v132 = vld [vmem:[#allocation5 + $0x210] sm:$0xff]
    %v133 = vld [vmem:[#allocation5 + $0x218] sm:$0xff]
    %v134 = vld [vmem:[#allocation5 + $0x220] sm:$0xff]
    %v135 = vld [vmem:[#allocation5 + $0x228] sm:$0xff]
    %v136 = vld [vmem:[#allocation5 + $0x230] sm:$0xff]
    %v137 = vld [vmem:[#allocation5 + $0x238] sm:$0xff]
    %v138 = vld [vmem:[#allocation5 + $0x240] sm:$0xff]
    %v139 = vld [vmem:[#allocation5 + $0x248] sm:$0xff]
    %v140 = vld [vmem:[#allocation5 + $0x250] sm:$0xff]
    %v141 = vld [vmem:[#allocation5 + $0x258] sm:$0xff]
    %v142 = vld [vmem:[#allocation5 + $0x260] sm:$0xff]
    %v143 = vld [vmem:[#allocation5 + $0x268] sm:$0xff]
    %v144 = vld [vmem:[#allocation5 + $0x270] sm:$0xff]
    %v145 = vld [vmem:[#allocation5 + $0x278] sm:$0xff]
    %v146 = vld [vmem:[#allocation5 + $0x280] sm:$0xff]
    %v147 = vld [vmem:[#allocation5 + $0x288] sm:$0xff]
    %v148 = vld [vmem:[#allocation5 + $0x290] sm:$0xff]
    %v149 = vld [vmem:[#allocation5 + $0x298] sm:$0xff]
    %v150 = vld [vmem:[#allocation5 + $0x2a0] sm:$0xff]
    %v151 = vld [vmem:[#allocation5 + $0x2a8] sm:$0xff]
    %v152 = vld [vmem:[#allocation5 + $0x2b0] sm:$0xff]
    %v153 = vld [vmem:[#allocation5 + $0x2b8] sm:$0xff]
    %v154 = vld [vmem:[#allocation5 + $0x2c0] sm:$0xff]
    %v155 = vld [vmem:[#allocation5 + $0x2c8] sm:$0xff]
    %v156 = vld [vmem:[#allocation5 + $0x2d0] sm:$0xff]
    %v157 = vld [vmem:[#allocation5 + $0x2d8] sm:$0xff]
    %v158 = vld [vmem:[#allocation5 + $0x2e0] sm:$0xff]
    %v159 = vld [vmem:[#allocation5 + $0x2e8] sm:$0xff]
    %v160 = vld [vmem:[#allocation5 + $0x2f0] sm:$0xff]
    %v161 = vld [vmem:[#allocation5 + $0x2f8] sm:$0xff]
    %v162 = vld [vmem:[#allocation5 + $0x300] sm:$0xff]
    %v163 = vld [vmem:[#allocation5 + $0x308] sm:$0xff]
    %v164 = vld [vmem:[#allocation5 + $0x310] sm:$0xff]
    %v165 = vld [vmem:[#allocation5 + $0x318] sm:$0xff]
    %v166 = vld [vmem:[#allocation5 + $0x320] sm:$0xff]
    %v167 = vld [vmem:[#allocation5 + $0x328] sm:$0xff]
    %v168 = vld [vmem:[#allocation5 + $0x330] sm:$0xff]
    %v169 = vld [vmem:[#allocation5 + $0x338] sm:$0xff]
    %v170 = vld [vmem:[#allocation5 + $0x340] sm:$0xff]
    %v171 = vld [vmem:[#allocation5 + $0x348] sm:$0xff]
    %v172 = vld [vmem:[#allocation5 + $0x350] sm:$0xff]
    %v173 = vld [vmem:[#allocation5 + $0x358] sm:$0xff]
    %v174 = vld [vmem:[#allocation5 + $0x360] sm:$0xff]
    %v175 = vld [vmem:[#allocation5 + $0x368] sm:$0xff]
    %v176 = vld [vmem:[#allocation5 + $0x370] sm:$0xff]
    %v177 = vld [vmem:[#allocation5 + $0x378] sm:$0xff]
    %v178 = vld [vmem:[#allocation5 + $0x380] sm:$0xff]
    %v179 = vld [vmem:[#allocation5 + $0x388] sm:$0xff]
    %v180 = vld [vmem:[#allocation5 + $0x390] sm:$0xff]
    %v181 = vld [vmem:[#allocation5 + $0x398] sm:$0xff]
    %v182 = vld [vmem:[#allocation5 + $0x3a0] sm:$0xff]
    %v183 = vld [vmem:[#allocation5 + $0x3a8] sm:$0xff]
    %v184 = vld [vmem:[#allocation5 + $0x3b0] sm:$0xff]
    %v185 = vld [vmem:[#allocation5 + $0x3b8] sm:$0xff]
    %v186 = vld [vmem:[#allocation5 + $0x3c0] sm:$0xff]
    %v187 = vld [vmem:[#allocation5 + $0x3c8] sm:$0xff]
    %v188 = vld [vmem:[#allocation5 + $0x3d0] sm:$0xff]
    %v189 = vld [vmem:[#allocation5 + $0x3d8] sm:$0xff]
    %v190 = vld [vmem:[#allocation5 + $0x3e0] sm:$0xff]
    %v191 = vld [vmem:[#allocation5 + $0x3e8] sm:$0xff]
    %v192 = vld [vmem:[#allocation5 + $0x3f0] sm:$0xff]
    %v193 = vld [vmem:[#allocation5 + $0x3f8] sm:$0xff]
    %v194 = vld [vmem:[#allocation5 + $0x400] sm:$0xff]
    %v195 = vld [vmem:[#allocation5 + $0x408] sm:$0xff]
    %v196 = vld [vmem:[#allocation5 + $0x410] sm:$0xff]
    %v197 = vld [vmem:[#allocation5 + $0x418] sm:$0xff]
    %v198 = vld [vmem:[#allocation5 + $0x420] sm:$0xff]
    %v199 = vld [vmem:[#allocation5 + $0x428] sm:$0xff]
    %v200 = vld [vmem:[#allocation5 + $0x430] sm:$0xff]
    %v201 = vld [vmem:[#allocation5 + $0x438] sm:$0xff]
    %v202 = vld [vmem:[#allocation5 + $0x440] sm:$0xff]
    %v203 = vld [vmem:[#allocation5 + $0x448] sm:$0xff]
    %v204 = vld [vmem:[#allocation5 + $0x450] sm:$0xff]
    %v205 = vld [vmem:[#allocation5 + $0x458] sm:$0xff]
    %v206 = vld [vmem:[#allocation5 + $0x460] sm:$0xff]
    %v207 = vld [vmem:[#allocation5 + $0x468] sm:$0xff]
    %v208 = vld [vmem:[#allocation5 + $0x470] sm:$0xff]
    %v209 = vld [vmem:[#allocation5 + $0x478] sm:$0xff]
    %v210 = vld [vmem:[#allocation5 + $0x480] sm:$0xff]
    %v211 = vld [vmem:[#allocation5 + $0x488] sm:$0xff]
    %v212 = vld [vmem:[#allocation5 + $0x490] sm:$0xff]
    %v213 = vld [vmem:[#allocation5 + $0x498] sm:$0xff]
    %v214 = vld [vmem:[#allocation5 + $0x4a0] sm:$0xff]
    %v215 = vld [vmem:[#allocation5 + $0x4a8] sm:$0xff]
    %v216 = vld [vmem:[#allocation5 + $0x4b0] sm:$0xff]
    %v217 = vld [vmem:[#allocation5 + $0x4b8] sm:$0xff]
    %v218 = vld [vmem:[#allocation5 + $0x4c0] sm:$0xff]
    %v219 = vld [vmem:[#allocation5 + $0x4c8] sm:$0xff]
    %v220 = vld [vmem:[#allocation5 + $0x4d0] sm:$0xff]
    %v221 = vld [vmem:[#allocation5 + $0x4d8] sm:$0xff]
    %v222 = vld [vmem:[#allocation5 + $0x4e0] sm:$0xff]
    %v223 = vld [vmem:[#allocation5 + $0x4e8] sm:$0xff]
    %v224 = vld [vmem:[#allocation5 + $0x4f0] sm:$0xff]
    %v225 = vld [vmem:[#allocation5 + $0x4f8] sm:$0xff]
    %v226 = vld [vmem:[#allocation5 + $0x500] sm:$0xff]
    %v227 = vld [vmem:[#allocation5 + $0x508] sm:$0xff]
    %v228 = vld [vmem:[#allocation5 + $0x510] sm:$0xff]
    %v229 = vld [vmem:[#allocation5 + $0x518] sm:$0xff]
    %v230 = vld [vmem:[#allocation5 + $0x520] sm:$0xff]
    %v231 = vld [vmem:[#allocation5 + $0x528] sm:$0xff]
    %v232 = vld [vmem:[#allocation5 + $0x530] sm:$0xff]
    %v233 = vld [vmem:[#allocation5 + $0x538] sm:$0xff]
    %v234 = vld [vmem:[#allocation5 + $0x540] sm:$0xff]
    %v235 = vld [vmem:[#allocation5 + $0x548] sm:$0xff]
    %v236 = vld [vmem:[#allocation5 + $0x550] sm:$0xff]
    %v237 = vld [vmem:[#allocation5 + $0x558] sm:$0xff]
    %v238 = vld [vmem:[#allocation5 + $0x560] sm:$0xff]
    %v239 = vld [vmem:[#allocation5 + $0x568] sm:$0xff]
    %v240 = vld [vmem:[#allocation5 + $0x570] sm:$0xff]
    %v241 = vld [vmem:[#allocation5 + $0x578] sm:$0xff]
    %v242 = vld [vmem:[#allocation5 + $0x580] sm:$0xff]
    %v243 = vld [vmem:[#allocation5 + $0x588] sm:$0xff]
    %v244 = vld [vmem:[#allocation5 + $0x590] sm:$0xff]
    %v245 = vld [vmem:[#allocation5 + $0x598] sm:$0xff]
    %v246 = vld [vmem:[#allocation5 + $0x5a0] sm:$0xff]
    %v247 = vld [vmem:[#allocation5 + $0x5a8] sm:$0xff]
    %v248 = vld [vmem:[#allocation5 + $0x5b0] sm:$0xff]
    %v249 = vld [vmem:[#allocation5 + $0x5b8] sm:$0xff]
    %v250 = vld [vmem:[#allocation5 + $0x5c0] sm:$0xff]
    %v251 = vld [vmem:[#allocation5 + $0x5c8] sm:$0xff]
    %v252 = vld [vmem:[#allocation5 + $0x5d0] sm:$0xff]
    %v253 = vld [vmem:[#allocation5 + $0x5d8] sm:$0xff]
    %v254 = vld [vmem:[#allocation5 + $0x5e0] sm:$0xff]
    %v255 = vld [vmem:[#allocation5 + $0x5e8] sm:$0xff]
    %v256 = vld [vmem:[#allocation5 + $0x5f0] sm:$0xff]
    %v257 = vld [vmem:[#allocation5 + $0x5f8] sm:$0xff]
    %v258 = vld [vmem:[#allocation5 + $0x600] sm:$0xff]
    %v259 = vld [vmem:[#allocation5 + $0x608] sm:$0xff]
    %v260 = vld [vmem:[#allocation5 + $0x610] sm:$0xff]
    %v261 = vld [vmem:[#allocation5 + $0x618] sm:$0xff]
    %v262 = vld [vmem:[#allocation5 + $0x620] sm:$0xff]
    %v263 = vld [vmem:[#allocation5 + $0x628] sm:$0xff]
    %v264 = vld [vmem:[#allocation5 + $0x630] sm:$0xff]
    %v265 = vld [vmem:[#allocation5 + $0x638] sm:$0xff]
    %v266 = vld [vmem:[#allocation5 + $0x640] sm:$0xff]
    %v267 = vld [vmem:[#allocation5 + $0x648] sm:$0xff]
    %v268 = vld [vmem:[#allocation5 + $0x650] sm:$0xff]
    %v269 = vld [vmem:[#allocation5 + $0x658] sm:$0xff]
    %v270 = vld [vmem:[#allocation5 + $0x660] sm:$0xff]
    %v271 = vld [vmem:[#allocation5 + $0x668] sm:$0xff]
    %v272 = vld [vmem:[#allocation5 + $0x670] sm:$0xff]
    %v273 = vld [vmem:[#allocation5 + $0x678] sm:$0xff]
    %v274 = vld [vmem:[#allocation5 + $0x680] sm:$0xff]
    %v275 = vld [vmem:[#allocation5 + $0x688] sm:$0xff]
    %v276 = vld [vmem:[#allocation5 + $0x690] sm:$0xff]
    %v277 = vld [vmem:[#allocation5 + $0x698] sm:$0xff]
    %v278 = vld [vmem:[#allocation5 + $0x6a0] sm:$0xff]
    %v279 = vld [vmem:[#allocation5 + $0x6a8] sm:$0xff]
    %v280 = vld [vmem:[#allocation5 + $0x6b0] sm:$0xff]
    %v281 = vld [vmem:[#allocation5 + $0x6b8] sm:$0xff]
    %v282 = vld [vmem:[#allocation5 + $0x6c0] sm:$0xff]
    %v283 = vld [vmem:[#allocation5 + $0x6c8] sm:$0xff]
    %v284 = vld [vmem:[#allocation5 + $0x6d0] sm:$0xff]
    %v285 = vld [vmem:[#allocation5 + $0x6d8] sm:$0xff]
    %v286 = vld [vmem:[#allocation5 + $0x6e0] sm:$0xff]
    %v287 = vld [vmem:[#allocation5 + $0x6e8] sm:$0xff]
    %v288 = vld [vmem:[#allocation5 + $0x6f0] sm:$0xff]
    %v289 = vld [vmem:[#allocation5 + $0x6f8] sm:$0xff]
    %v290 = vld [vmem:[#allocation5 + $0x700] sm:$0xff]
    %v291 = vld [vmem:[#allocation5 + $0x708] sm:$0xff]
    %v292 = vld [vmem:[#allocation5 + $0x710] sm:$0xff]
    %v293 = vld [vmem:[#allocation5 + $0x718] sm:$0xff]
    %v294 = vld [vmem:[#allocation5 + $0x720] sm:$0xff]
    %v295 = vld [vmem:[#allocation5 + $0x728] sm:$0xff]
    %v296 = vld [vmem:[#allocation5 + $0x730] sm:$0xff]
    %v297 = vld [vmem:[#allocation5 + $0x738] sm:$0xff]
    %v298 = vld [vmem:[#allocation5 + $0x740] sm:$0xff]
    %v299 = vld [vmem:[#allocation5 + $0x748] sm:$0xff]
    %v300 = vld [vmem:[#allocation5 + $0x750] sm:$0xff]
    %v301 = vld [vmem:[#allocation5 + $0x758] sm:$0xff]
    %v302 = vld [vmem:[#allocation5 + $0x760] sm:$0xff]
    %v303 = vld [vmem:[#allocation5 + $0x768] sm:$0xff]
    %v304 = vld [vmem:[#allocation5 + $0x770] sm:$0xff]
    %v305 = vld [vmem:[#allocation5 + $0x778] sm:$0xff]
    %v306 = vld [vmem:[#allocation5 + $0x780] sm:$0xff]
    %v307 = vld [vmem:[#allocation5 + $0x788] sm:$0xff]
    %v308 = vld [vmem:[#allocation5 + $0x790] sm:$0xff]
    %v309 = vld [vmem:[#allocation5 + $0x798] sm:$0xff]
    %v310 = vld [vmem:[#allocation5 + $0x7a0] sm:$0xff]
    %v311 = vld [vmem:[#allocation5 + $0x7a8] sm:$0xff]
    %v312 = vld [vmem:[#allocation5 + $0x7b0] sm:$0xff]
    %v313 = vld [vmem:[#allocation5 + $0x7b8] sm:$0xff]
    %v314 = vld [vmem:[#allocation5 + $0x7c0] sm:$0xff]
    %v315 = vld [vmem:[#allocation5 + $0x7c8] sm:$0xff]
    %v316 = vld [vmem:[#allocation5 + $0x7d0] sm:$0xff]
    %v317 = vld [vmem:[#allocation5 + $0x7d8] sm:$0xff]
    %v318 = vld [vmem:[#allocation5 + $0x7e0] sm:$0xff]
    %v319 = vld [vmem:[#allocation5 + $0x7e8] sm:$0xff]
    %v320 = vld [vmem:[#allocation5 + $0x7f0] sm:$0xff]
    %v321 = vld [vmem:[#allocation5 + $0x7f8] sm:$0xff]
    %v322 = vld [vmem:[#allocation5 + $0x800] sm:$0xff]
    %v323 = vld [vmem:[#allocation5 + $0x808] sm:$0xff]
    %v324 = vld [vmem:[#allocation5 + $0x810] sm:$0xff]
    %v325 = vld [vmem:[#allocation5 + $0x818] sm:$0xff]
    %v326 = vld [vmem:[#allocation5 + $0x820] sm:$0xff]
    %v327 = vld [vmem:[#allocation5 + $0x828] sm:$0xff]
    %v328 = vld [vmem:[#allocation5 + $0x830] sm:$0xff]
    %v329 = vld [vmem:[#allocation5 + $0x838] sm:$0xff]
    %v330 = vld [vmem:[#allocation5 + $0x840] sm:$0xff]
    %v331 = vld [vmem:[#allocation5 + $0x848] sm:$0xff]
    %v332 = vld [vmem:[#allocation5 + $0x850] sm:$0xff]
    %v333 = vld [vmem:[#allocation5 + $0x858] sm:$0xff]
    %v334 = vld [vmem:[#allocation5 + $0x860] sm:$0xff]
    %v335 = vld [vmem:[#allocation5 + $0x868] sm:$0xff]
    %v336 = vld [vmem:[#allocation5 + $0x870] sm:$0xff]
    %v337 = vld [vmem:[#allocation5 + $0x878] sm:$0xff]
    %v338 = vld [vmem:[#allocation5 + $0x880] sm:$0xff]
    %v339 = vld [vmem:[#allocation5 + $0x888] sm:$0xff]
    %v340 = vld [vmem:[#allocation5 + $0x890] sm:$0xff]
    %v341 = vld [vmem:[#allocation5 + $0x898] sm:$0xff]
    %v342 = vld [vmem:[#allocation5 + $0x8a0] sm:$0xff]
    %v343 = vld [vmem:[#allocation5 + $0x8a8] sm:$0xff]
    %v344 = vld [vmem:[#allocation5 + $0x8b0] sm:$0xff]
    %v345 = vld [vmem:[#allocation5 + $0x8b8] sm:$0xff]
    %v346 = vld [vmem:[#allocation5 + $0x8c0] sm:$0xff]
    %v347 = vld [vmem:[#allocation5 + $0x8c8] sm:$0xff]
    %v348 = vld [vmem:[#allocation5 + $0x8d0] sm:$0xff]
    %v349 = vld [vmem:[#allocation5 + $0x8d8] sm:$0xff]
    %v350 = vld [vmem:[#allocation5 + $0x8e0] sm:$0xff]
    %v351 = vld [vmem:[#allocation5 + $0x8e8] sm:$0xff]
    %v352 = vld [vmem:[#allocation5 + $0x8f0] sm:$0xff]
    %v353 = vld [vmem:[#allocation5 + $0x8f8] sm:$0xff]
    %v354 = vld [vmem:[#allocation5 + $0x900] sm:$0xff]
    %v355 = vld [vmem:[#allocation5 + $0x908] sm:$0xff]
    %v356 = vld [vmem:[#allocation5 + $0x910] sm:$0xff]
    %v357 = vld [vmem:[#allocation5 + $0x918] sm:$0xff]
    %v358 = vld [vmem:[#allocation5 + $0x920] sm:$0xff]
    %v359 = vld [vmem:[#allocation5 + $0x928] sm:$0xff]
    %v360 = vld [vmem:[#allocation5 + $0x930] sm:$0xff]
    %v361 = vld [vmem:[#allocation5 + $0x938] sm:$0xff]
    %v362 = vld [vmem:[#allocation5 + $0x940] sm:$0xff]
    %v363 = vld [vmem:[#allocation5 + $0x948] sm:$0xff]
    %v364 = vld [vmem:[#allocation5 + $0x950] sm:$0xff]
    %v365 = vld [vmem:[#allocation5 + $0x958] sm:$0xff]
    %v366 = vld [vmem:[#allocation5 + $0x960] sm:$0xff]
    %v367 = vld [vmem:[#allocation5 + $0x968] sm:$0xff]
    %v368 = vld [vmem:[#allocation5 + $0x970] sm:$0xff]
    %v369 = vld [vmem:[#allocation5 + $0x978] sm:$0xff]
    %v370 = vld [vmem:[#allocation5 + $0x980] sm:$0xff]
    %v371 = vld [vmem:[#allocation5 + $0x988] sm:$0xff]
    %v372 = vld [vmem:[#allocation5 + $0x990] sm:$0xff]
    %v373 = vld [vmem:[#allocation5 + $0x998] sm:$0xff]
    %v374 = vld [vmem:[#allocation5 + $0x9a0] sm:$0xff]
    %v375 = vld [vmem:[#allocation5 + $0x9a8] sm:$0xff]
    %v376 = vld [vmem:[#allocation5 + $0x9b0] sm:$0xff]
    %v377 = vld [vmem:[#allocation5 + $0x9b8] sm:$0xff]
    %v378 = vld [vmem:[#allocation5 + $0x9c0] sm:$0xff]
    %v379 = vld [vmem:[#allocation5 + $0x9c8] sm:$0xff]
    %v380 = vld [vmem:[#allocation5 + $0x9d0] sm:$0xff]
    %v381 = vld [vmem:[#allocation5 + $0x9d8] sm:$0xff]
    %v382 = vld [vmem:[#allocation5 + $0x9e0] sm:$0xff]
    %v383 = vld [vmem:[#allocation5 + $0x9e8] sm:$0xff]
    %v384 = vld [vmem:[#allocation5 + $0x9f0] sm:$0xff]
    %v385 = vld [vmem:[#allocation5 + $0x9f8] sm:$0xff]
    %v386 = vld [vmem:[#allocation5 + $0xa00] sm:$0xff]
    %v387 = vld [vmem:[#allocation5 + $0xa08] sm:$0xff]
    %v388 = vld [vmem:[#allocation5 + $0xa10] sm:$0xff]
    %v389 = vld [vmem:[#allocation5 + $0xa18] sm:$0xff]
    %v390 = vld [vmem:[#allocation5 + $0xa20] sm:$0xff]
    %v391 = vld [vmem:[#allocation5 + $0xa28] sm:$0xff]
    %v392 = vld [vmem:[#allocation5 + $0xa30] sm:$0xff]
    %v393 = vld [vmem:[#allocation5 + $0xa38] sm:$0xff]
    %v394 = vld [vmem:[#allocation5 + $0xa40] sm:$0xff]
    %v395 = vld [vmem:[#allocation5 + $0xa48] sm:$0xff]
    %v396 = vld [vmem:[#allocation5 + $0xa50] sm:$0xff]
    %v397 = vld [vmem:[#allocation5 + $0xa58] sm:$0xff]
    %v398 = vld [vmem:[#allocation5 + $0xa60] sm:$0xff]
    %v399 = vld [vmem:[#allocation5 + $0xa68] sm:$0xff]
    %v400 = vld [vmem:[#allocation5 + $0xa70] sm:$0xff]
    %v401 = vld [vmem:[#allocation5 + $0xa78] sm:$0xff]
    %v402 = vld [vmem:[#allocation5 + $0xa80] sm:$0xff]
    %v403 = vld [vmem:[#allocation5 + $0xa88] sm:$0xff]
    %v404 = vld [vmem:[#allocation5 + $0xa90] sm:$0xff]
    %v405 = vld [vmem:[#allocation5 + $0xa98] sm:$0xff]
    %v406 = vld [vmem:[#allocation5 + $0xaa0] sm:$0xff]
    %v407 = vld [vmem:[#allocation5 + $0xaa8] sm:$0xff]
    %v408 = vld [vmem:[#allocation5 + $0xab0] sm:$0xff]
    %v409 = vld [vmem:[#allocation5 + $0xab8] sm:$0xff]
    %v410 = vld [vmem:[#allocation5 + $0xac0] sm:$0xff]
    %v411 = vld [vmem:[#allocation5 + $0xac8] sm:$0xff]
    %v412 = vld [vmem:[#allocation5 + $0xad0] sm:$0xff]
    %v413 = vld [vmem:[#allocation5 + $0xad8] sm:$0xff]
    %v414 = vld [vmem:[#allocation5 + $0xae0] sm:$0xff]
    %v415 = vld [vmem:[#allocation5 + $0xae8] sm:$0xff]
    %v416 = vld [vmem:[#allocation5 + $0xaf0] sm:$0xff]
    %v417 = vld [vmem:[#allocation5 + $0xaf8] sm:$0xff]
    %v418 = vld [vmem:[#allocation5 + $0xb00] sm:$0xff]
    %v419 = vld [vmem:[#allocation5 + $0xb08] sm:$0xff]
    %v420 = vld [vmem:[#allocation5 + $0xb10] sm:$0xff]
    %v421 = vld [vmem:[#allocation5 + $0xb18] sm:$0xff]
    %v422 = vld [vmem:[#allocation5 + $0xb20] sm:$0xff]
    %v423 = vld [vmem:[#allocation5 + $0xb28] sm:$0xff]
    %v424 = vld [vmem:[#allocation5 + $0xb30] sm:$0xff]
    %v425 = vld [vmem:[#allocation5 + $0xb38] sm:$0xff]
    %v426 = vld [vmem:[#allocation5 + $0xb40] sm:$0xff]
    %v427 = vld [vmem:[#allocation5 + $0xb48] sm:$0xff]
    %v428 = vld [vmem:[#allocation5 + $0xb50] sm:$0xff]
    %v429 = vld [vmem:[#allocation5 + $0xb58] sm:$0xff]
    %v430 = vld [vmem:[#allocation5 + $0xb60] sm:$0xff]
    %v431 = vld [vmem:[#allocation5 + $0xb68] sm:$0xff]
    %v432 = vld [vmem:[#allocation5 + $0xb70] sm:$0xff]
    %v433 = vld [vmem:[#allocation5 + $0xb78] sm:$0xff]
    %v434 = vld [vmem:[#allocation5 + $0xb80] sm:$0xff]
    %v435 = vld [vmem:[#allocation5 + $0xb88] sm:$0xff]
    %v436 = vld [vmem:[#allocation5 + $0xb90] sm:$0xff]
    %v437 = vld [vmem:[#allocation5 + $0xb98] sm:$0xff]
    %v438 = vld [vmem:[#allocation5 + $0xba0] sm:$0xff]
    %v439 = vld [vmem:[#allocation5 + $0xba8] sm:$0xff]
    %v440 = vld [vmem:[#allocation5 + $0xbb0] sm:$0xff]
    %v441 = vld [vmem:[#allocation5 + $0xbb8] sm:$0xff]
    %v442 = vld [vmem:[#allocation5 + $0xbc0] sm:$0xff]
    %v443 = vld [vmem:[#allocation5 + $0xbc8] sm:$0xff]
    %v444 = vld [vmem:[#allocation5 + $0xbd0] sm:$0xff]
    %v445 = vld [vmem:[#allocation5 + $0xbd8] sm:$0xff]
    %v446 = vld [vmem:[#allocation5 + $0xbe0] sm:$0xff]
    %v447 = vld [vmem:[#allocation5 + $0xbe8] sm:$0xff]
    %v448 = vld [vmem:[#allocation5 + $0xbf0] sm:$0xff]
    %v449 = vld [vmem:[#allocation5 + $0xbf8] sm:$0xff]
    %v450 = vld [vmem:[#allocation7] sm:$0xf]
    %v452 = vlaneseq
    %v453 = vshrl.u32 %v452, 7
    %v454 = vsub.s32 0, %v453
    %v455 = vrot.slane %v450, %v454
    %v456 = vlaneseq
    %v457 = vshrl.u32 %v456, 7
    %v458 = vsub.s32 1, %v457
    %v459 = vrot.slane %v450, %v458
    %v460 = vlaneseq
    %v461 = vshrl.u32 %v460, 7
    %v462 = vsub.s32 2, %v461
    %v463 = vrot.slane %v450, %v462
    %v464 = vlaneseq
    %v465 = vshrl.u32 %v464, 7
    %v466 = vsub.s32 3, %v465
    %v467 = vrot.slane %v450, %v466
    %472 = vmatprep.subr.mxu0 %v127
    %473 = vmatpush1.msra.mxu0 %v126
    %474 = vmatprep.subr.mxu0 %v123
    %475 = vmatpush1.msra.mxu0 %v122
    %476 = vmatprep.subr.mxu0 %v119
    %477 = vmatpush1.msra.mxu0 %v118
    %478 = vmatprep.subr.mxu0 %v115
    %479 = vmatpush1.msra.mxu0 %v114
    %480 = vmatprep.subr.mxu0 %v111
    %481 = vmatpush1.msra.mxu0 %v110
    %482 = vmatprep.subr.mxu0 %v107
    %483 = vmatpush1.msra.mxu0 %v106
    %484 = vmatprep.subr.mxu0 %v103
    %485 = vmatpush1.msra.mxu0 %v102
    %486 = vmatprep.subr.mxu0 %v99
    %487 = vmatpush1.msra.mxu0 %v98
    %488 = vmatprep.subr.mxu0 %v95
    %489 = vmatpush1.msra.mxu0 %v94
    %490 = vmatprep.subr.mxu0 %v91
    %491 = vmatpush1.msra.mxu0 %v90
    %492 = vmatprep.subr.mxu0 %v87
    %493 = vmatpush1.msra.mxu0 %v86
    %494 = vmatprep.subr.mxu0 %v83
    %495 = vmatpush1.msra.mxu0 %v82
    %496 = vmatprep.subr.mxu0 %v79
    %497 = vmatpush1.msra.mxu0 %v78
    %498 = vmatprep.subr.mxu0 %v75
    %499 = vmatpush1.msra.mxu0 %v74
    %500 = vmatprep.subr.mxu0 %v71
    %501 = vmatpush1.msra.mxu0 %v70
    %502 = vmatprep.subr.mxu0 %v67
    %503 = vmatpush1.msra.mxu0 %v66
    %504 = vmatprep.subr.mxu0 %v191
    %505 = vmatpush2.msra.mxu0 %v190
    %506 = vmatprep.subr.mxu0 %v187
    %507 = vmatpush2.msra.mxu0 %v186
    %508 = vmatprep.subr.mxu0 %v183
    %509 = vmatpush2.msra.mxu0 %v182
    %510 = vmatprep.subr.mxu0 %v179
    %511 = vmatpush2.msra.mxu0 %v178
    %512 = vmatprep.subr.mxu0 %v175
    %513 = vmatpush2.msra.mxu0 %v174
    %514 = vmatprep.subr.mxu0 %v171
    %515 = vmatpush2.msra.mxu0 %v170
    %516 = vmatprep.subr.mxu0 %v167
    %517 = vmatpush2.msra.mxu0 %v166
    %518 = vmatprep.subr.mxu0 %v163
    %519 = vmatpush2.msra.mxu0 %v162
    %520 = vmatprep.subr.mxu0 %v159
    %521 = vmatpush2.msra.mxu0 %v158
    %522 = vmatprep.subr.mxu0 %v155
    %523 = vmatpush2.msra.mxu0 %v154
    %524 = vmatprep.subr.mxu0 %v151
    %525 = vmatpush2.msra.mxu0 %v150
    %526 = vmatprep.subr.mxu0 %v147
    %527 = vmatpush2.msra.mxu0 %v146
    %528 = vmatprep.subr.mxu0 %v143
    %529 = vmatpush2.msra.mxu0 %v142
    %530 = vmatprep.subr.mxu0 %v139
    %531 = vmatpush2.msra.mxu0 %v138
    %532 = vmatprep.subr.mxu0 %v135
    %533 = vmatpush2.msra.mxu0 %v134
    %534 = vmatprep.subr.mxu0 %v131
    %535 = vmatpush2.msra.mxu0 %v130
    %536 = vmatprep.mubr.f32.mxu0 %v55
    %537 = vmatmul.mubr.f32.gmra.mxu0 %v54
    %v538 = vpop.f32.mrf.mxu0
    %v539 = vadd.f32 %v455, %v538
    %v540 = vpop.f32.mrf.mxu0
    %v541 = vadd.f32 %v459, %v540
    %542 = vmatprep.mubr.f32.mxu0 %v61
    %543 = vmatmul.mubr.f32.gmra.mxu0 %v60
    %v544 = vpop.f32.mrf.mxu0
    %v545 = vadd.f32 %v455, %v544
    %v546 = vpop.f32.mrf.mxu0
    %v547 = vadd.f32 %v459, %v546
    %548 = vdwg.mxu0
    %549 = vmatprep.subr.mxu0 %v255
    %550 = vmatpush1.msra.mxu0 %v254
    %551 = vmatprep.subr.mxu0 %v251
    %552 = vmatpush1.msra.mxu0 %v250
    %553 = vmatprep.subr.mxu0 %v247
    %554 = vmatpush1.msra.mxu0 %v246
    %555 = vmatprep.subr.mxu0 %v243
    %556 = vmatpush1.msra.mxu0 %v242
    %557 = vmatprep.subr.mxu0 %v239
    %558 = vmatpush1.msra.mxu0 %v238
    %559 = vmatprep.subr.mxu0 %v235
    %560 = vmatpush1.msra.mxu0 %v234
    %561 = vmatprep.subr.mxu0 %v231
    %562 = vmatpush1.msra.mxu0 %v230
    %563 = vmatprep.subr.mxu0 %v227
    %564 = vmatpush1.msra.mxu0 %v226
    %565 = vmatprep.subr.mxu0 %v223
    %566 = vmatpush1.msra.mxu0 %v222
    %567 = vmatprep.subr.mxu0 %v219
    %568 = vmatpush1.msra.mxu0 %v218
    %569 = vmatprep.subr.mxu0 %v215
    %570 = vmatpush1.msra.mxu0 %v214
    %571 = vmatprep.subr.mxu0 %v211
    %572 = vmatpush1.msra.mxu0 %v210
    %573 = vmatprep.subr.mxu0 %v207
    %574 = vmatpush1.msra.mxu0 %v206
    %575 = vmatprep.subr.mxu0 %v203
    %576 = vmatpush1.msra.mxu0 %v202
    %577 = vmatprep.subr.mxu0 %v199
    %578 = vmatpush1.msra.mxu0 %v198
    %579 = vmatprep.subr.mxu0 %v195
    %580 = vmatpush1.msra.mxu0 %v194
    %581 = vmatprep.subr.mxu0 %v319
    %582 = vmatpush2.msra.mxu0 %v318
    %583 = vmatprep.subr.mxu0 %v315
    %584 = vmatpush2.msra.mxu0 %v314
    %585 = vmatprep.subr.mxu0 %v311
    %586 = vmatpush2.msra.mxu0 %v310
    %587 = vmatprep.subr.mxu0 %v307
    %588 = vmatpush2.msra.mxu0 %v306
    %589 = vmatprep.subr.mxu0 %v303
    %590 = vmatpush2.msra.mxu0 %v302
    %591 = vmatprep.subr.mxu0 %v299
    %592 = vmatpush2.msra.mxu0 %v298
    %593 = vmatprep.subr.mxu0 %v295
    %594 = vmatpush2.msra.mxu0 %v294
    %595 = vmatprep.subr.mxu0 %v291
    %596 = vmatpush2.msra.mxu0 %v290
    %597 = vmatprep.subr.mxu0 %v287
    %598 = vmatpush2.msra.mxu0 %v286
    %599 = vmatprep.subr.mxu0 %v283
    %600 = vmatpush2.msra.mxu0 %v282
    %601 = vmatprep.subr.mxu0 %v279
    %602 = vmatpush2.msra.mxu0 %v278
    %603 = vmatprep.subr.mxu0 %v275
    %604 = vmatpush2.msra.mxu0 %v274
    %605 = vmatprep.subr.mxu0 %v271
    %606 = vmatpush2.msra.mxu0 %v270
    %607 = vmatprep.subr.mxu0 %v267
    %608 = vmatpush2.msra.mxu0 %v266
    %609 = vmatprep.subr.mxu0 %v263
    %610 = vmatpush2.msra.mxu0 %v262
    %611 = vmatprep.subr.mxu0 %v259
    %612 = vmatpush2.msra.mxu0 %v258
    %613 = vmatprep.mubr.f32.mxu0 %v57
    %614 = vmatmul.mubr.f32.gmra.mxu0 %v56
    %v615 = vpop.f32.mrf.mxu0
    %v616 = vadd.f32 %v539, %v615
    %v617 = vpop.f32.mrf.mxu0
    %v618 = vadd.f32 %v541, %v617
    %619 = vmatprep.mubr.f32.mxu0 %v63
    %620 = vmatmul.mubr.f32.gmra.mxu0 %v62
    %v621 = vpop.f32.mrf.mxu0
    %v622 = vadd.f32 %v545, %v621
    %v623 = vpop.f32.mrf.mxu0
    %v624 = vadd.f32 %v547, %v623
    %625 = vdwg.mxu0
    %626 = vmatprep.subr.mxu0 %v383
    %627 = vmatpush1.msra.mxu0 %v382
    %628 = vmatprep.subr.mxu0 %v379
    %629 = vmatpush1.msra.mxu0 %v378
    %630 = vmatprep.subr.mxu0 %v375
    %631 = vmatpush1.msra.mxu0 %v374
    %632 = vmatprep.subr.mxu0 %v371
    %633 = vmatpush1.msra.mxu0 %v370
    %634 = vmatprep.subr.mxu0 %v367
    %635 = vmatpush1.msra.mxu0 %v366
    %636 = vmatprep.subr.mxu0 %v363
    %637 = vmatpush1.msra.mxu0 %v362
    %638 = vmatprep.subr.mxu0 %v359
    %639 = vmatpush1.msra.mxu0 %v358
    %640 = vmatprep.subr.mxu0 %v355
    %641 = vmatpush1.msra.mxu0 %v354
    %642 = vmatprep.subr.mxu0 %v351
    %643 = vmatpush1.msra.mxu0 %v350
    %644 = vmatprep.subr.mxu0 %v347
    %645 = vmatpush1.msra.mxu0 %v346
    %646 = vmatprep.subr.mxu0 %v343
    %647 = vmatpush1.msra.mxu0 %v342
    %648 = vmatprep.subr.mxu0 %v339
    %649 = vmatpush1.msra.mxu0 %v338
    %650 = vmatprep.subr.mxu0 %v335
    %651 = vmatpush1.msra.mxu0 %v334
    %652 = vmatprep.subr.mxu0 %v331
    %653 = vmatpush1.msra.mxu0 %v330
    %654 = vmatprep.subr.mxu0 %v327
    %655 = vmatpush1.msra.mxu0 %v326
    %656 = vmatprep.subr.mxu0 %v323
    %657 = vmatpush1.msra.mxu0 %v322
    %658 = vmatprep.subr.mxu0 %v447
    %659 = vmatpush2.msra.mxu0 %v446
    %660 = vmatprep.subr.mxu0 %v443
    %661 = vmatpush2.msra.mxu0 %v442
    %662 = vmatprep.subr.mxu0 %v439
    %663 = vmatpush2.msra.mxu0 %v438
    %664 = vmatprep.subr.mxu0 %v435
    %665 = vmatpush2.msra.mxu0 %v434
    %666 = vmatprep.subr.mxu0 %v431
    %667 = vmatpush2.msra.mxu0 %v430
    %668 = vmatprep.subr.mxu0 %v427
    %669 = vmatpush2.msra.mxu0 %v426
    %670 = vmatprep.subr.mxu0 %v423
    %671 = vmatpush2.msra.mxu0 %v422
    %672 = vmatprep.subr.mxu0 %v419
    %673 = vmatpush2.msra.mxu0 %v418
    %674 = vmatprep.subr.mxu0 %v415
    %675 = vmatpush2.msra.mxu0 %v414
    %676 = vmatprep.subr.mxu0 %v411
    %677 = vmatpush2.msra.mxu0 %v410
    %678 = vmatprep.subr.mxu0 %v407
    %679 = vmatpush2.msra.mxu0 %v406
    %680 = vmatprep.subr.mxu0 %v403
    %681 = vmatpush2.msra.mxu0 %v402
    %682 = vmatprep.subr.mxu0 %v399
    %683 = vmatpush2.msra.mxu0 %v398
    %684 = vmatprep.subr.mxu0 %v395
    %685 = vmatpush2.msra.mxu0 %v394
    %686 = vmatprep.subr.mxu0 %v391
    %687 = vmatpush2.msra.mxu0 %v390
    %688 = vmatprep.subr.mxu0 %v387
    %689 = vmatpush2.msra.mxu0 %v386
    %690 = vmatprep.mubr.f32.mxu0 %v59
    %691 = vmatmul.mubr.f32.gmra.mxu0 %v58
    %v692 = vpop.f32.mrf.mxu0
    %v693 = vadd.f32 %v616, %v692
    %v694 = vpop.f32.mrf.mxu0
    %v695 = vadd.f32 %v618, %v694
    %696 = vmatprep.mubr.f32.mxu0 %v65
    %697 = vmatmul.mubr.f32.gmra.mxu0 %v64
    %v698 = vpop.f32.mrf.mxu0
    %v699 = vadd.f32 %v622, %v698
    %v700 = vpop.f32.mrf.mxu0
    %v701 = vadd.f32 %v624, %v700
    %702 = vdwg.mxu0
    %703 = vmatprep.subr.mxu0 %v129
    %704 = vmatpush1.msra.mxu0 %v128
    %705 = vmatprep.subr.mxu0 %v125
    %706 = vmatpush1.msra.mxu0 %v124
    %707 = vmatprep.subr.mxu0 %v121
    %708 = vmatpush1.msra.mxu0 %v120
    %709 = vmatprep.subr.mxu0 %v117
    %710 = vmatpush1.msra.mxu0 %v116
    %711 = vmatprep.subr.mxu0 %v113
    %712 = vmatpush1.msra.mxu0 %v112
    %713 = vmatprep.subr.mxu0 %v109
    %714 = vmatpush1.msra.mxu0 %v108
    %715 = vmatprep.subr.mxu0 %v105
    %716 = vmatpush1.msra.mxu0 %v104
    %717 = vmatprep.subr.mxu0 %v101
    %718 = vmatpush1.msra.mxu0 %v100
    %719 = vmatprep.subr.mxu0 %v97
    %720 = vmatpush1.msra.mxu0 %v96
    %721 = vmatprep.subr.mxu0 %v93
    %722 = vmatpush1.msra.mxu0 %v92
    %723 = vmatprep.subr.mxu0 %v89
    %724 = vmatpush1.msra.mxu0 %v88
    %725 = vmatprep.subr.mxu0 %v85
    %726 = vmatpush1.msra.mxu0 %v84
    %727 = vmatprep.subr.mxu0 %v81
    %728 = vmatpush1.msra.mxu0 %v80
    %729 = vmatprep.subr.mxu0 %v77
    %730 = vmatpush1.msra.mxu0 %v76
    %731 = vmatprep.subr.mxu0 %v73
    %732 = vmatpush1.msra.mxu0 %v72
    %733 = vmatprep.subr.mxu0 %v69
    %734 = vmatpush1.msra.mxu0 %v68
    %735 = vmatprep.subr.mxu0 %v193
    %736 = vmatpush2.msra.mxu0 %v192
    %737 = vmatprep.subr.mxu0 %v189
    %738 = vmatpush2.msra.mxu0 %v188
    %739 = vmatprep.subr.mxu0 %v185
    %740 = vmatpush2.msra.mxu0 %v184
    %741 = vmatprep.subr.mxu0 %v181
    %742 = vmatpush2.msra.mxu0 %v180
    %743 = vmatprep.subr.mxu0 %v177
    %744 = vmatpush2.msra.mxu0 %v176
    %745 = vmatprep.subr.mxu0 %v173
    %746 = vmatpush2.msra.mxu0 %v172
    %747 = vmatprep.subr.mxu0 %v169
    %748 = vmatpush2.msra.mxu0 %v168
    %749 = vmatprep.subr.mxu0 %v165
    %750 = vmatpush2.msra.mxu0 %v164
    %751 = vmatprep.subr.mxu0 %v161
    %752 = vmatpush2.msra.mxu0 %v160
    %753 = vmatprep.subr.mxu0 %v157
    %754 = vmatpush2.msra.mxu0 %v156
    %755 = vmatprep.subr.mxu0 %v153
    %756 = vmatpush2.msra.mxu0 %v152
    %757 = vmatprep.subr.mxu0 %v149
    %758 = vmatpush2.msra.mxu0 %v148
    %759 = vmatprep.subr.mxu0 %v145
    %760 = vmatpush2.msra.mxu0 %v144
    %761 = vmatprep.subr.mxu0 %v141
    %762 = vmatpush2.msra.mxu0 %v140
    %763 = vmatprep.subr.mxu0 %v137
    %764 = vmatpush2.msra.mxu0 %v136
    %765 = vmatprep.subr.mxu0 %v133
    %766 = vmatpush2.msra.mxu0 %v132
    %767 = vmatprep.mubr.f32.mxu0 %v55
    %768 = vmatmul.mubr.f32.gmra.mxu0 %v54
    %v769 = vpop.f32.mrf.mxu0
    %v770 = vadd.f32 %v463, %v769
    %v771 = vpop.f32.mrf.mxu0
    %v772 = vadd.f32 %v467, %v771
    %773 = vmatprep.mubr.f32.mxu0 %v61
    %774 = vmatmul.mubr.f32.gmra.mxu0 %v60
    %v775 = vpop.f32.mrf.mxu0
    %v776 = vadd.f32 %v463, %v775
    %v777 = vpop.f32.mrf.mxu0
    %v778 = vadd.f32 %v467, %v777
    %779 = vdwg.mxu0
    %780 = vmatprep.subr.mxu0 %v257
    %781 = vmatpush1.msra.mxu0 %v256
    %782 = vmatprep.subr.mxu0 %v253
    %783 = vmatpush1.msra.mxu0 %v252
    %784 = vmatprep.subr.mxu0 %v249
    %785 = vmatpush1.msra.mxu0 %v248
    %786 = vmatprep.subr.mxu0 %v245
    %787 = vmatpush1.msra.mxu0 %v244
    %788 = vmatprep.subr.mxu0 %v241
    %789 = vmatpush1.msra.mxu0 %v240
    %790 = vmatprep.subr.mxu0 %v237
    %791 = vmatpush1.msra.mxu0 %v236
    %792 = vmatprep.subr.mxu0 %v233
    %793 = vmatpush1.msra.mxu0 %v232
    %794 = vmatprep.subr.mxu0 %v229
    %795 = vmatpush1.msra.mxu0 %v228
    %796 = vmatprep.subr.mxu0 %v225
    %797 = vmatpush1.msra.mxu0 %v224
    %798 = vmatprep.subr.mxu0 %v221
    %799 = vmatpush1.msra.mxu0 %v220
    %800 = vmatprep.subr.mxu0 %v217
    %801 = vmatpush1.msra.mxu0 %v216
    %802 = vmatprep.subr.mxu0 %v213
    %803 = vmatpush1.msra.mxu0 %v212
    %804 = vmatprep.subr.mxu0 %v209
    %805 = vmatpush1.msra.mxu0 %v208
    %806 = vmatprep.subr.mxu0 %v205
    %807 = vmatpush1.msra.mxu0 %v204
    %808 = vmatprep.subr.mxu0 %v201
    %809 = vmatpush1.msra.mxu0 %v200
    %810 = vmatprep.subr.mxu0 %v197
    %811 = vmatpush1.msra.mxu0 %v196
    %812 = vmatprep.subr.mxu0 %v321
    %813 = vmatpush2.msra.mxu0 %v320
    %814 = vmatprep.subr.mxu0 %v317
    %815 = vmatpush2.msra.mxu0 %v316
    %816 = vmatprep.subr.mxu0 %v313
    %817 = vmatpush2.msra.mxu0 %v312
    %818 = vmatprep.subr.mxu0 %v309
    %819 = vmatpush2.msra.mxu0 %v308
    %820 = vmatprep.subr.mxu0 %v305
    %821 = vmatpush2.msra.mxu0 %v304
    %822 = vmatprep.subr.mxu0 %v301
    %823 = vmatpush2.msra.mxu0 %v300
    %824 = vmatprep.subr.mxu0 %v297
    %825 = vmatpush2.msra.mxu0 %v296
    %826 = vmatprep.subr.mxu0 %v293
    %827 = vmatpush2.msra.mxu0 %v292
    %828 = vmatprep.subr.mxu0 %v289
    %829 = vmatpush2.msra.mxu0 %v288
    %830 = vmatprep.subr.mxu0 %v285
    %831 = vmatpush2.msra.mxu0 %v284
    %832 = vmatprep.subr.mxu0 %v281
    %833 = vmatpush2.msra.mxu0 %v280
    %834 = vmatprep.subr.mxu0 %v277
    %835 = vmatpush2.msra.mxu0 %v276
    %836 = vmatprep.subr.mxu0 %v273
    %837 = vmatpush2.msra.mxu0 %v272
    %838 = vmatprep.subr.mxu0 %v269
    %839 = vmatpush2.msra.mxu0 %v268
    %840 = vmatprep.subr.mxu0 %v265
    %841 = vmatpush2.msra.mxu0 %v264
    %842 = vmatprep.subr.mxu0 %v261
    %843 = vmatpush2.msra.mxu0 %v260
    %844 = vmatprep.mubr.f32.mxu0 %v57
    %845 = vmatmul.mubr.f32.gmra.mxu0 %v56
    %v846 = vpop.f32.mrf.mxu0
    %v847 = vadd.f32 %v770, %v846
    %v848 = vpop.f32.mrf.mxu0
    %v849 = vadd.f32 %v772, %v848
    %850 = vmatprep.mubr.f32.mxu0 %v63
    %851 = vmatmul.mubr.f32.gmra.mxu0 %v62
    %v852 = vpop.f32.mrf.mxu0
    %v853 = vadd.f32 %v776, %v852
    %v854 = vpop.f32.mrf.mxu0
    %v855 = vadd.f32 %v778, %v854
    %856 = vdwg.mxu0
    %857 = vmatprep.subr.mxu0 %v385
    %858 = vmatpush1.msra.mxu0 %v384
    %859 = vmatprep.subr.mxu0 %v381
    %860 = vmatpush1.msra.mxu0 %v380
    %861 = vmatprep.subr.mxu0 %v377
    %862 = vmatpush1.msra.mxu0 %v376
    %863 = vmatprep.subr.mxu0 %v373
    %864 = vmatpush1.msra.mxu0 %v372
    %865 = vmatprep.subr.mxu0 %v369
    %866 = vmatpush1.msra.mxu0 %v368
    %867 = vmatprep.subr.mxu0 %v365
    %868 = vmatpush1.msra.mxu0 %v364
    %869 = vmatprep.subr.mxu0 %v361
    %870 = vmatpush1.msra.mxu0 %v360
    %871 = vmatprep.subr.mxu0 %v357
    %872 = vmatpush1.msra.mxu0 %v356
    %873 = vmatprep.subr.mxu0 %v353
    %874 = vmatpush1.msra.mxu0 %v352
    %875 = vmatprep.subr.mxu0 %v349
    %876 = vmatpush1.msra.mxu0 %v348
    %877 = vmatprep.subr.mxu0 %v345
    %878 = vmatpush1.msra.mxu0 %v344
    %879 = vmatprep.subr.mxu0 %v341
    %880 = vmatpush1.msra.mxu0 %v340
    %881 = vmatprep.subr.mxu0 %v337
    %882 = vmatpush1.msra.mxu0 %v336
    %883 = vmatprep.subr.mxu0 %v333
    %884 = vmatpush1.msra.mxu0 %v332
    %885 = vmatprep.subr.mxu0 %v329
    %886 = vmatpush1.msra.mxu0 %v328
    %887 = vmatprep.subr.mxu0 %v325
    %888 = vmatpush1.msra.mxu0 %v324
    %889 = vmatprep.subr.mxu0 %v449
    %890 = vmatpush2.msra.mxu0 %v448
    %891 = vmatprep.subr.mxu0 %v445
    %892 = vmatpush2.msra.mxu0 %v444
    %893 = vmatprep.subr.mxu0 %v441
    %894 = vmatpush2.msra.mxu0 %v440
    %895 = vmatprep.subr.mxu0 %v437
    %896 = vmatpush2.msra.mxu0 %v436
    %897 = vmatprep.subr.mxu0 %v433
    %898 = vmatpush2.msra.mxu0 %v432
    %899 = vmatprep.subr.mxu0 %v429
    %900 = vmatpush2.msra.mxu0 %v428
    %901 = vmatprep.subr.mxu0 %v425
    %902 = vmatpush2.msra.mxu0 %v424
    %903 = vmatprep.subr.mxu0 %v421
    %904 = vmatpush2.msra.mxu0 %v420
    %905 = vmatprep.subr.mxu0 %v417
    %906 = vmatpush2.msra.mxu0 %v416
    %907 = vmatprep.subr.mxu0 %v413
    %908 = vmatpush2.msra.mxu0 %v412
    %909 = vmatprep.subr.mxu0 %v409
    %910 = vmatpush2.msra.mxu0 %v408
    %911 = vmatprep.subr.mxu0 %v405
    %912 = vmatpush2.msra.mxu0 %v404
    %913 = vmatprep.subr.mxu0 %v401
    %914 = vmatpush2.msra.mxu0 %v400
    %915 = vmatprep.subr.mxu0 %v397
    %916 = vmatpush2.msra.mxu0 %v396
    %917 = vmatprep.subr.mxu0 %v393
    %918 = vmatpush2.msra.mxu0 %v392
    %919 = vmatprep.subr.mxu0 %v389
    %920 = vmatpush2.msra.mxu0 %v388
    %921 = vmatprep.mubr.f32.mxu0 %v59
    %922 = vmatmul.mubr.f32.gmra.mxu0 %v58
    %v923 = vpop.f32.mrf.mxu0
    %v924 = vadd.f32 %v847, %v923
    %v925 = vpop.f32.mrf.mxu0
    %v926 = vadd.f32 %v849, %v925
    %927 = vmatprep.mubr.f32.mxu0 %v65
    %928 = vmatmul.mubr.f32.gmra.mxu0 %v64
    %v929 = vpop.f32.mrf.mxu0
    %v930 = vadd.f32 %v853, %v929
    %v931 = vpop.f32.mrf.mxu0
    %v932 = vadd.f32 %v855, %v931
    %933 = vdwg.mxu0
    %934 = vst [vmem:[#allocation8] sm:$0xff] %v693
    %935 = vst [vmem:[#allocation8 + $0x8] sm:$0xff] %v695
    %936 = vst [vmem:[#allocation8 + $0x10] sm:$0xff] %v924
    %937 = vst [vmem:[#allocation8 + $0x18] sm:$0xff] %v926
    %938 = vst [vmem:[#allocation8 + $0x20] sm:$0xff] %v699
    %939 = vst [vmem:[#allocation8 + $0x28] sm:$0xff] %v701
    %940 = vst [vmem:[#allocation8 + $0x30] sm:$0xff] %v930
    %941 = vst [vmem:[#allocation8 + $0x38] sm:$0xff] %v932
    // Predicated region
    $region26: #{vision_proj_pallas.1} parent=1 // pred_check
      _
    $region27: #{vision_proj_pallas.1} parent=1 // pred_check_branch
      %943 = sbr.rel (0) target = $region29
    $region28: #{vision_proj_pallas.1} parent=1 // pred_region
      %s945 = ssub.s32 1024, 1024
      %946 = vsyncadd [#allocation4], %s945
      %s947 = sshll.u32 [#allocation8], 4
      %s948 = int_to_ptr.vmem [resolvable:$true] %s947
      %953 = dma.vmem_to_hbm [thread:$0]  %s948, 1024, %s3, [#allocation4], 512, 512, 32
    $region29: #{vision_proj_pallas.1} parent=1 // pred_fallthru
      _
    // Predicated region
    $region30: #{vision_proj_pallas.1} parent=1 // pred_check
      _
    $region31: #{vision_proj_pallas.1} parent=1 // pred_check_branch
      %955 = sbr.rel (0) target = $region33
    $region32: #{vision_proj_pallas.1} parent=1 // pred_region
      %956 = dma.done [#allocation4], 1024
    $region33: #{vision_proj_pallas.1} parent=1 // pred_fallthru
      _
    %957 = vsyncpa [#allocation3], 1
    %958 = vsyncpa [#allocation6], 1
    %959 = vsyncpa [#allocation4], 1

</llo_original>
